<compile_context>
chip_gen: v6e
topology: v6e:2x2x1
jax: 0.10.0
libtpu: 0.0.40
codegen_flags: <defaults>
</compile_context>

<pallas_src>
import numpy as np

import jax
import jax.numpy as jnp
from jax.experimental import pallas as pl
from jax.experimental.pallas import tpu as pltpu


def _tv_kernel(x_ref, acc_h_ref, acc_w_ref, corr_h_ref, corr_w_ref):
    """One grid step: accumulate squared circular diffs of P planes.

    acc_h/acc_w are (H, W) f32 resident accumulator outputs; corr_h (1, W) and
    corr_w (H, 1) hold the wrap-around terms to be subtracted in the wrapper.
    """
    i = pl.program_id(0)

    @pl.when(i == 0)
    def _init():
        acc_h_ref[...] = jnp.zeros_like(acc_h_ref)
        acc_w_ref[...] = jnp.zeros_like(acc_w_ref)
        corr_h_ref[...] = jnp.zeros_like(corr_h_ref)
        corr_w_ref[...] = jnp.zeros_like(corr_w_ref)

    x = x_ref[...]                       # (P, H, W), input dtype
    _, hh, ww = x.shape

    # Circular shift-by-one along H (sublane) and W (lane) on the XLU instead
    # of shifted slices (which force hidden VMEM re-layout copies).
    x_h = pltpu.roll(x, shift=1, axis=1)
    x_w = pltpu.roll(x, shift=1, axis=2)

    dh = (x - x_h).astype(jnp.float32)   # diff in input dtype, accumulate f32
    dw = (x - x_w).astype(jnp.float32)

    # Reduce over the plane axis only: element-wise vreg adds, no cross-lane /
    # cross-sublane reduction inside the hot loop.
    acc_h_ref[...] += jnp.sum(dh * dh, axis=0)          # (H, W)
    acc_w_ref[...] += jnp.sum(dw * dw, axis=0)          # (H, W)

    # The circular roll counts exactly one wrap-around pair per plane in each
    # direction; accumulate it separately (tiny) and subtract in the wrapper.
    wrap_h = (x[:, :1, :] - x[:, hh - 1:, :]).astype(jnp.float32)   # (P, 1, W)
    wrap_w = (x[:, :, :1] - x[:, :, ww - 1:]).astype(jnp.float32)   # (P, H, 1)
    corr_h_ref[...] += jnp.sum(wrap_h * wrap_h, axis=0)             # (1, W)
    corr_w_ref[...] += jnp.sum(wrap_w * wrap_w, axis=0)             # (H, 1)


def tv_loss(x, tv_loss_weight: float = 1.0):
    """TV loss identical to the PyTorch TVLoss.forward (x is NCHW)."""
    n, c, h, w = x.shape
    if h < 2 or w < 2:
        raise ValueError("TVLoss requires H >= 2 and W >= 2 (count would be 0).")

    m = n * c
    x_flat = x.reshape(m, h, w)
    itemsize = np.dtype(x.dtype).itemsize

    # VMEM footprint of one plane after (8, 128) tile padding.
    h_pad = ((h + 7) // 8) * 8
    w_pad = ((w + 127) // 128) * 128
    plane_vmem = h_pad * w_pad * itemsize

    # Planes per grid step: as many as fit a conservative budget for the
    # double-buffered input block (accumulator outputs are P-independent and
    # tiny).  8 MiB is safe w.r.t. v5e's 16 MiB default scoped VMEM and v7x's
    # 64 MiB physical VMEM; the explicit limit below adds headroom.
    vmem_budget = 8 * 1024 * 1024
    p = int(min(m, max(1, vmem_budget // (2 * plane_vmem))))

    # Prefer a divisor of m close to p so the zero-pad copy can be skipped.
    div = next((d for d in range(p, 0, -1) if m % d == 0), 1)
    if div * 2 >= p:
        p = div
    num_chunks = -(-m // p)
    pad = num_chunks * p - m
    if pad:
        # Zero planes contribute nothing to either TV term.
        x_flat = jnp.concatenate(
            [x_flat, jnp.zeros((pad, h, w), dtype=x_flat.dtype)], axis=0)

    cost = pl.CostEstimate(
        flops=6 * m * h * w,
        transcendentals=0,
        bytes_accessed=m * h * w * itemsize + 4 * (2 * h * w + h + w),
    )

    acc_h, acc_w, corr_h, corr_w = pl.pallas_call(
        _tv_kernel,
        out_shape=(
            jax.ShapeDtypeStruct((h, w), jnp.float32),
            jax.ShapeDtypeStruct((h, w), jnp.float32),
            jax.ShapeDtypeStruct((1, w), jnp.float32),
            jax.ShapeDtypeStruct((h, 1), jnp.float32),
        ),
        grid_spec=pltpu.PrefetchScalarGridSpec(
            num_scalar_prefetch=0,
            grid=(num_chunks,),
            in_specs=[pl.BlockSpec((p, h, w), lambda i: (i, 0, 0))],
            out_specs=[
                pl.BlockSpec((h, w), lambda i: (0, 0)),
                pl.BlockSpec((h, w), lambda i: (0, 0)),
                pl.BlockSpec((1, w), lambda i: (0, 0)),
                pl.BlockSpec((h, 1), lambda i: (0, 0)),
            ],
        ),
        compiler_params=pltpu.CompilerParams(
            dimension_semantics=("arbitrary",),      # resident accumulators
            vmem_limit_bytes=32 * 1024 * 1024,
        ),
        cost_estimate=cost,
    )(x_flat)

    # Finish the (tiny) reduction in the wrapper and subtract the wrap terms.
    h_tv = jnp.sum(acc_h) - jnp.sum(corr_h)
    w_tv = jnp.sum(acc_w) - jnp.sum(corr_w)

    count_h = c * (h - 1) * w
    count_w = c * h * (w - 1)
    return tv_loss_weight * 2.0 * (h_tv / count_h + w_tv / count_w) / n


def _tv_loss_ref(x, tv_loss_weight: float = 1.0):
    """Plain-JAX reference mirroring the PyTorch code."""
    n, c, h, w = x.shape
    count_h = c * (h - 1) * w
    count_w = c * h * (w - 1)
    h_tv = jnp.sum(jnp.square(x[:, :, 1:, :] - x[:, :, : h - 1, :]))
    w_tv = jnp.sum(jnp.square(x[:, :, :, 1:] - x[:, :, :, : w - 1]))
    return tv_loss_weight * 2.0 * (h_tv / count_h + w_tv / count_w) / n


if __name__ == "__main__":
    key = jax.random.PRNGKey(0)
    x = jax.random.normal(key, (2, 4, 16, 16), dtype=jnp.float32)

    out = tv_loss(x, tv_loss_weight=1.0)
    out = jax.block_until_ready(out)

    ref = _tv_loss_ref(x, tv_loss_weight=1.0)
    assert jnp.allclose(out, ref, rtol=1e-5, atol=1e-5), (out, ref)

    print("KERNEL_OK")
</pallas_src>

<mosaic_0001>
module attributes {stable_mosaic.version = 11 : i64} {
  func.func @_tv_kernel(%arg0: i32, %arg1: memref<8x16x16xf32, #tpu.memory_space<vmem>>, %arg2: memref<16x16xf32, #tpu.memory_space<vmem>>, %arg3: memref<16x16xf32, #tpu.memory_space<vmem>>, %arg4: memref<1x16xf32, #tpu.memory_space<vmem>>, %arg5: memref<16x1xf32, #tpu.memory_space<vmem>>) attributes {dimension_semantics = [#tpu.dimension_semantics<arbitrary>], iteration_bounds = array<i64: 1>, scalar_prefetch = 0 : i64, scratch_operands = 0 : i64, tpu.core_type = #tpu.core_type<tc>, window_params = [{transform_indices = @transform_0, window_bounds = array<i64: 8, 16, 16>}, {pipeline_mode = #tpu.pipeline_mode<synchronous>, transform_indices = @transform_1, window_bounds = array<i64: 16, 16>}, {pipeline_mode = #tpu.pipeline_mode<synchronous>, transform_indices = @transform_2, window_bounds = array<i64: 16, 16>}, {pipeline_mode = #tpu.pipeline_mode<synchronous>, transform_indices = @transform_3, window_bounds = array<i64: 1, 16>}, {pipeline_mode = #tpu.pipeline_mode<synchronous>, transform_indices = @transform_4, window_bounds = array<i64: 16, 1>}]} {
    %c0_i32 = arith.constant 0 : i32
    %0 = arith.cmpi eq, %arg0, %c0_i32 : i32
    %1 = arith.extui %0 : i1 to i32
    %c0_i32_0 = arith.constant 0 : i32
    %2 = arith.cmpi ne, %1, %c0_i32_0 : i32
    scf.if %2 {
      %cst_23 = arith.constant 0.000000e+00 : f32
      %34 = vector.broadcast %cst_23 : f32 to vector<16x16xf32>
      %c0_24 = arith.constant 0 : index
      %c0_25 = arith.constant 0 : index
      %35 = vector.load %arg2[%c0_24, %c0_25] : memref<16x16xf32, #tpu.memory_space<vmem>>, vector<16x16xf32>
      tpu.vector_store %arg2[%c0_24, %c0_25], %34 {strides = array<i32>} : memref<16x16xf32, #tpu.memory_space<vmem>>, vector<16x16xf32>,
      %cst_26 = arith.constant 0.000000e+00 : f32
      %36 = vector.broadcast %cst_26 : f32 to vector<16x16xf32>
      %c0_27 = arith.constant 0 : index
      %c0_28 = arith.constant 0 : index
      %37 = vector.load %arg3[%c0_27, %c0_28] : memref<16x16xf32, #tpu.memory_space<vmem>>, vector<16x16xf32>
      tpu.vector_store %arg3[%c0_27, %c0_28], %36 {strides = array<i32>} : memref<16x16xf32, #tpu.memory_space<vmem>>, vector<16x16xf32>,
      %cst_29 = arith.constant 0.000000e+00 : f32
      %38 = vector.broadcast %cst_29 : f32 to vector<1x16xf32>
      %c0_30 = arith.constant 0 : index
      %c0_31 = arith.constant 0 : index
      %39 = vector.load %arg4[%c0_30, %c0_31] : memref<1x16xf32, #tpu.memory_space<vmem>>, vector<1x16xf32>
      tpu.vector_store %arg4[%c0_30, %c0_31], %38 {strides = array<i32>} : memref<1x16xf32, #tpu.memory_space<vmem>>, vector<1x16xf32>,
      %cst_32 = arith.constant 0.000000e+00 : f32
      %40 = vector.broadcast %cst_32 : f32 to vector<16x1xf32>
      %c0_33 = arith.constant 0 : index
      %c0_34 = arith.constant 0 : index
      %41 = vector.load %arg5[%c0_33, %c0_34] : memref<16x1xf32, #tpu.memory_space<vmem>>, vector<16x1xf32>
      tpu.vector_store %arg5[%c0_33, %c0_34], %40 {strides = array<i32>} : memref<16x1xf32, #tpu.memory_space<vmem>>, vector<16x1xf32>,
    } else {
    }
    %c0 = arith.constant 0 : index
    %c0_1 = arith.constant 0 : index
    %c0_2 = arith.constant 0 : index
    %3 = vector.load %arg1[%c0, %c0_1, %c0_2] : memref<8x16x16xf32, #tpu.memory_space<vmem>>, vector<8x16x16xf32>
    %c1_i32 = arith.constant 1 : i32
    %4 = tpu.dynamic_rotate %3 by %c1_i32 dim 1 : vector<8x16x16xf32>, i32 -> vector<8x16x16xf32>
    %c1_i32_3 = arith.constant 1 : i32
    %5 = tpu.dynamic_rotate %3 by %c1_i32_3 dim 2 : vector<8x16x16xf32>, i32 -> vector<8x16x16xf32>
    %6 = arith.subf %3, %4 : vector<8x16x16xf32>
    %7 = arith.subf %3, %5 : vector<8x16x16xf32>
    %c0_4 = arith.constant 0 : index
    %c0_5 = arith.constant 0 : index
    %8 = vector.load %arg2[%c0_4, %c0_5] : memref<16x16xf32, #tpu.memory_space<vmem>>, vector<16x16xf32>
    %9 = arith.mulf %6, %6 : vector<8x16x16xf32>
    %cst = arith.constant dense<0.000000e+00> : vector<16x16xf32>
    %10 = vector.multi_reduction <add>, %9, %cst [0] : vector<8x16x16xf32> to vector<16x16xf32>
    %11 = arith.addf %8, %10 : vector<16x16xf32>
    %c0_6 = arith.constant 0 : index
    %c0_7 = arith.constant 0 : index
    %12 = vector.load %arg2[%c0_6, %c0_7] : memref<16x16xf32, #tpu.memory_space<vmem>>, vector<16x16xf32>
    tpu.vector_store %arg2[%c0_6, %c0_7], %11 {strides = array<i32>} : memref<16x16xf32, #tpu.memory_space<vmem>>, vector<16x16xf32>,
    %c0_8 = arith.constant 0 : index
    %c0_9 = arith.constant 0 : index
    %13 = vector.load %arg3[%c0_8, %c0_9] : memref<16x16xf32, #tpu.memory_space<vmem>>, vector<16x16xf32>
    %14 = arith.mulf %7, %7 : vector<8x16x16xf32>
    %cst_10 = arith.constant dense<0.000000e+00> : vector<16x16xf32>
    %15 = vector.multi_reduction <add>, %14, %cst_10 [0] : vector<8x16x16xf32> to vector<16x16xf32>
    %16 = arith.addf %13, %15 : vector<16x16xf32>
    %c0_11 = arith.constant 0 : index
    %c0_12 = arith.constant 0 : index
    %17 = vector.load %arg3[%c0_11, %c0_12] : memref<16x16xf32, #tpu.memory_space<vmem>>, vector<16x16xf32>
    tpu.vector_store %arg3[%c0_11, %c0_12], %16 {strides = array<i32>} : memref<16x16xf32, #tpu.memory_space<vmem>>, vector<16x16xf32>,
    %18 = vector.extract_strided_slice %3 {offsets = [0, 0, 0], sizes = [8, 1, 16], strides = [1, 1, 1]} : vector<8x16x16xf32> to vector<8x1x16xf32>
    %19 = vector.extract_strided_slice %3 {offsets = [0, 15, 0], sizes = [8, 1, 16], strides = [1, 1, 1]} : vector<8x16x16xf32> to vector<8x1x16xf32>
    %20 = arith.subf %18, %19 : vector<8x1x16xf32>
    %21 = vector.extract_strided_slice %3 {offsets = [0, 0, 0], sizes = [8, 16, 1], strides = [1, 1, 1]} : vector<8x16x16xf32> to vector<8x16x1xf32>
    %22 = vector.extract_strided_slice %3 {offsets = [0, 0, 15], sizes = [8, 16, 1], strides = [1, 1, 1]} : vector<8x16x16xf32> to vector<8x16x1xf32>
    %23 = arith.subf %21, %22 : vector<8x16x1xf32>
    %c0_13 = arith.constant 0 : index
    %c0_14 = arith.constant 0 : index
    %24 = vector.load %arg4[%c0_13, %c0_14] : memref<1x16xf32, #tpu.memory_space<vmem>>, vector<1x16xf32>
    %25 = arith.mulf %20, %20 : vector<8x1x16xf32>
    %cst_15 = arith.constant dense<0.000000e+00> : vector<1x16xf32>
    %26 = vector.multi_reduction <add>, %25, %cst_15 [0] : vector<8x1x16xf32> to vector<1x16xf32>
    %27 = arith.addf %24, %26 : vector<1x16xf32>
    %c0_16 = arith.constant 0 : index
    %c0_17 = arith.constant 0 : index
    %28 = vector.load %arg4[%c0_16, %c0_17] : memref<1x16xf32, #tpu.memory_space<vmem>>, vector<1x16xf32>
    tpu.vector_store %arg4[%c0_16, %c0_17], %27 {strides = array<i32>} : memref<1x16xf32, #tpu.memory_space<vmem>>, vector<1x16xf32>,
    %c0_18 = arith.constant 0 : index
    %c0_19 = arith.constant 0 : index
    %29 = vector.load %arg5[%c0_18, %c0_19] : memref<16x1xf32, #tpu.memory_space<vmem>>, vector<16x1xf32>
    %30 = arith.mulf %23, %23 : vector<8x16x1xf32>
    %cst_20 = arith.constant dense<0.000000e+00> : vector<16x1xf32>
    %31 = vector.multi_reduction <add>, %30, %cst_20 [0] : vector<8x16x1xf32> to vector<16x1xf32>
    %32 = arith.addf %29, %31 : vector<16x1xf32>
    %c0_21 = arith.constant 0 : index
    %c0_22 = arith.constant 0 : index
    %33 = vector.load %arg5[%c0_21, %c0_22] : memref<16x1xf32, #tpu.memory_space<vmem>>, vector<16x1xf32>
    tpu.vector_store %arg5[%c0_21, %c0_22], %32 {strides = array<i32>} : memref<16x1xf32, #tpu.memory_space<vmem>>, vector<16x1xf32>,
    return
  }
  func.func @transform_0(%arg0: i32) -> (i32, i32, i32) {
    %c0_i32 = arith.constant 0 : i32
    %c0_i32_0 = arith.constant 0 : i32
    %c0_i32_1 = arith.constant 0 : i32
    return %arg0, %c0_i32, %c0_i32_0 : i32, i32, i32
  }
  func.func @transform_1(%arg0: i32) -> (i32, i32) {
    %c0_i32 = arith.constant 0 : i32
    %c0_i32_0 = arith.constant 0 : i32
    %c0_i32_1 = arith.constant 0 : i32
    return %c0_i32, %c0_i32_0 : i32, i32
  }
  func.func @transform_2(%arg0: i32) -> (i32, i32) {
    %c0_i32 = arith.constant 0 : i32
    %c0_i32_0 = arith.constant 0 : i32
    %c0_i32_1 = arith.constant 0 : i32
    return %c0_i32, %c0_i32_0 : i32, i32
  }
  func.func @transform_3(%arg0: i32) -> (i32, i32) {
    %c0_i32 = arith.constant 0 : i32
    %c0_i32_0 = arith.constant 0 : i32
    %c0_i32_1 = arith.constant 0 : i32
    return %c0_i32, %c0_i32_0 : i32, i32
  }
  func.func @transform_4(%arg0: i32) -> (i32, i32) {
    %c0_i32 = arith.constant 0 : i32
    %c0_i32_0 = arith.constant 0 : i32
    %c0_i32_1 = arith.constant 0 : i32
    return %c0_i32, %c0_i32_0 : i32, i32
  }
}

</mosaic_0001>

<llo_original>
// kernel: tpu_custom_call.1
$region0: #{tpu_custom_call.1}
  #allocation0 [shape = 'u32[]', space=smem, size = 0x4, offset = 0x4, fixed_abs, tag = 'smem constant byte address 0x4 - core index']
  #allocation1 [shape = 'u32[144,128]{1,0:T(1,128)}', space=vmem, size = 0x12000, scoped, tag = 'internal scratch']
  %s0 = inlined_call_operand.hbm [shape: f32[8,16,16], index: 0, kind: input, shape index: {}]
  %s1 = inlined_call_operand.hbm [shape: f32[16,16], index: 1, kind: output, shape index: {0}]
  %s2 = inlined_call_operand.hbm [shape: f32[16,16], index: 2, kind: output, shape index: {1}]
  %s3 = inlined_call_operand.hbm [shape: f32[1,16], index: 3, kind: output, shape index: {2}]
  %s4 = inlined_call_operand.vmem [shape: f32[16,1], index: 4, kind: output, shape index: {3}]
  %5 = xla_tuple %s1, %s2, %s3, %s4
  %s6 = sld [smem:[#allocation0]]
  $region46: #{tpu_custom_call.1} parent=0
    _
  %s8 = ssub.s32 1, %s6
  %s9 = scalar_select 0, %s8, %s6
  $region1: #{tpu_custom_call.1} parent=0
    #allocation2 [shape = 'u8[65536]{0}', space=vmem, size = 0x10000, scoped, tag = 'input window, operand 0, single buffered']
    #allocation3 [shape = 's32[1]{0}', space=sflag, size = 0x4, scoped, tag = 'scoped memory for tpu_custom_call.1']
    #allocation4 [shape = 's32[1]{0}', space=sflag, size = 0x4, scoped, tag = 'scoped memory for tpu_custom_call.1']
    #allocation5 [shape = 'u8[8192]{0}', space=vmem, size = 0x2000, scoped, tag = 'output window, operand 0, single buffered']
    #allocation6 [shape = 'u8[8192]{0}', space=vmem, size = 0x2000, scoped, tag = 'output window, operand 1, single buffered']
    #allocation7 [shape = 's32[1]{0}', space=sflag, size = 0x4, scoped, tag = 'scoped memory for tpu_custom_call.1']
    #allocation8 [shape = 'u8[512]{0}', space=vmem, size = 0x400, scoped, tag = 'output window, operand 2, single buffered']
    %10 = vsyncpa [#allocation3], 0
    %11 = vsyncpa [#allocation4], 0
    %12 = vsyncpa [#allocation7], 0
    // Predicated region
    $region2: #{tpu_custom_call.1} parent=1 // pred_check
      _
    $region3: #{tpu_custom_call.1} parent=1 // pred_check_branch
      %14 = sbr.rel (0) target = $region5
    $region4: #{tpu_custom_call.1} parent=1 // pred_region
      %s16 = ssub.s32 2048, 2048
      %17 = vsyncadd [#allocation3], %s16
      %s18 = sshll.u32 [#allocation2], 4
      %s19 = int_to_ptr.vmem [resolvable:$true] %s18
      %24 = dma.hbm_to_vmem [thread:$0]  %s0, 2048, %s19, [#allocation3], 128, 128, 8
    $region5: #{tpu_custom_call.1} parent=1 // pred_fallthru
      _
    // Predicated region
    $region6: #{tpu_custom_call.1} parent=1 // pred_check
      _
    $region7: #{tpu_custom_call.1} parent=1 // pred_check_branch
      %26 = sbr.rel (0) target = $region9
    $region8: #{tpu_custom_call.1} parent=1 // pred_region
      %27 = dma.done [#allocation3], 2048
    $region9: #{tpu_custom_call.1} parent=1 // pred_fallthru
      _
    %p28 = scmp.eq.s32.totalorder 0, 0
    // Predicated region
    $region10: #{tpu_custom_call.1} parent=1 // pred_check
      %p29 = pneg %p28
    $region11: #{tpu_custom_call.1} parent=1 // pred_check_branch
      %31 = sbr.rel (%p29) target = $region13
    $region12: #{tpu_custom_call.1} parent=1 // pred_region
      %vm32 = vcmask 130048
      %33 = vst.msk [vmem:[#allocation5] sm:$0xff] %vm32, 0.0
      %34 = vst.msk [vmem:[#allocation5 + $0x8] sm:$0xff] %vm32, 0.0
      %35 = vst.msk [vmem:[#allocation6] sm:$0xff] %vm32, 0.0
      %36 = vst.msk [vmem:[#allocation6 + $0x8] sm:$0xff] %vm32, 0.0
      %vm37 = vcmask 122880
      %38 = vst.msk [vmem:[#allocation8] sm:$0x1] %vm37, 0.0
      %vm39 = vcmask 7168
      %40 = vst.msk [vmem:[%s4] sm:$0xff] %vm39, 0.0
      %41 = vst.msk [vmem:[%s4 + $0x8] sm:$0xff] %vm39, 0.0
    $region13: #{tpu_custom_call.1} parent=1 // pred_fallthru
      _
    %v42 = vld [vmem:[#allocation2] sm:$0xff]
    %v43 = vld [vmem:[#allocation2 + $0x8] sm:$0xff]
    %v44 = vld [vmem:[#allocation2 + $0x10] sm:$0xff]
    %v45 = vld [vmem:[#allocation2 + $0x18] sm:$0xff]
    %v46 = vld [vmem:[#allocation2 + $0x20] sm:$0xff]
    %v47 = vld [vmem:[#allocation2 + $0x28] sm:$0xff]
    %v48 = vld [vmem:[#allocation2 + $0x30] sm:$0xff]
    %v49 = vld [vmem:[#allocation2 + $0x38] sm:$0xff]
    %v50 = vld [vmem:[#allocation2 + $0x40] sm:$0xff]
    %v51 = vld [vmem:[#allocation2 + $0x48] sm:$0xff]
    %v52 = vld [vmem:[#allocation2 + $0x50] sm:$0xff]
    %v53 = vld [vmem:[#allocation2 + $0x58] sm:$0xff]
    %v54 = vld [vmem:[#allocation2 + $0x60] sm:$0xff]
    %v55 = vld [vmem:[#allocation2 + $0x68] sm:$0xff]
    %v56 = vld [vmem:[#allocation2 + $0x70] sm:$0xff]
    %v57 = vld [vmem:[#allocation2 + $0x78] sm:$0xff]
    %v58 = vrot.slane %v42, 7
    %v59 = vrot.slane %v44, 7
    %v60 = vrot.slane %v46, 7
    %v61 = vrot.slane %v48, 7
    %v62 = vrot.slane %v50, 7
    %v63 = vrot.slane %v52, 7
    %v64 = vrot.slane %v54, 7
    %v65 = vrot.slane %v56, 7
    %v66 = vrot.slane %v43, 7
    %v67 = vrot.slane %v45, 7
    %v68 = vrot.slane %v47, 7
    %v69 = vrot.slane %v49, 7
    %v70 = vrot.slane %v51, 7
    %v71 = vrot.slane %v53, 7
    %v72 = vrot.slane %v55, 7
    %v73 = vrot.slane %v57, 7
    %v74 = vlaneseq
    %v75 = vshrl.u32 %v74, 7
    %vm76 = vcmp.lt.s32.totalorder %v75, 1
    %v77 = vsel %vm76, %v58, %v66
    %v78 = vsel %vm76, %v59, %v67
    %v79 = vsel %vm76, %v60, %v68
    %v80 = vsel %vm76, %v61, %v69
    %v81 = vsel %vm76, %v62, %v70
    %v82 = vsel %vm76, %v63, %v71
    %v83 = vsel %vm76, %v64, %v72
    %v84 = vsel %vm76, %v65, %v73
    %v85 = vsel %vm76, %v66, %v58
    %v86 = vsel %vm76, %v67, %v59
    %v87 = vsel %vm76, %v68, %v60
    %v88 = vsel %vm76, %v69, %v61
    %v89 = vsel %vm76, %v70, %v62
    %v90 = vsel %vm76, %v71, %v63
    %v91 = vsel %vm76, %v72, %v64
    %v92 = vsel %vm76, %v73, %v65
    %vm93 = vcmask 1047680
    %94 = vrot.lane.b32.xlu0 %v42, 16
    %v95 = vpop.permute.xlu0 %94
    %v96 = vsel %vm93, %v95, %v42
    %97 = vrot.lane.b32.xlu0 %v43, 16
    %v98 = vpop.permute.xlu0 %97
    %v99 = vsel %vm93, %v98, %v43
    %100 = vrot.lane.b32.xlu0 %v44, 16
    %v101 = vpop.permute.xlu0 %100
    %v102 = vsel %vm93, %v101, %v44
    %103 = vrot.lane.b32.xlu0 %v45, 16
    %v104 = vpop.permute.xlu0 %103
    %v105 = vsel %vm93, %v104, %v45
    %106 = vrot.lane.b32.xlu0 %v46, 16
    %v107 = vpop.permute.xlu0 %106
    %v108 = vsel %vm93, %v107, %v46
    %109 = vrot.lane.b32.xlu0 %v47, 16
    %v110 = vpop.permute.xlu0 %109
    %v111 = vsel %vm93, %v110, %v47
    %112 = vrot.lane.b32.xlu0 %v48, 16
    %v113 = vpop.permute.xlu0 %112
    %v114 = vsel %vm93, %v113, %v48
    %115 = vrot.lane.b32.xlu0 %v49, 16
    %v116 = vpop.permute.xlu0 %115
    %v117 = vsel %vm93, %v116, %v49
    %118 = vrot.lane.b32.xlu0 %v50, 16
    %v119 = vpop.permute.xlu0 %118
    %v120 = vsel %vm93, %v119, %v50
    %121 = vrot.lane.b32.xlu0 %v51, 16
    %v122 = vpop.permute.xlu0 %121
    %v123 = vsel %vm93, %v122, %v51
    %124 = vrot.lane.b32.xlu0 %v52, 16
    %v125 = vpop.permute.xlu0 %124
    %v126 = vsel %vm93, %v125, %v52
    %127 = vrot.lane.b32.xlu0 %v53, 16
    %v128 = vpop.permute.xlu0 %127
    %v129 = vsel %vm93, %v128, %v53
    %130 = vrot.lane.b32.xlu0 %v54, 16
    %v131 = vpop.permute.xlu0 %130
    %v132 = vsel %vm93, %v131, %v54
    %133 = vrot.lane.b32.xlu0 %v55, 16
    %v134 = vpop.permute.xlu0 %133
    %v135 = vsel %vm93, %v134, %v55
    %136 = vrot.lane.b32.xlu0 %v56, 16
    %v137 = vpop.permute.xlu0 %136
    %v138 = vsel %vm93, %v137, %v56
    %139 = vrot.lane.b32.xlu0 %v57, 16
    %v140 = vpop.permute.xlu0 %139
    %v141 = vsel %vm93, %v140, %v57
    %142 = vrot.lane.b32.xlu0 %v96, 16
    %v143 = vpop.permute.xlu0 %142
    %144 = vrot.lane.b32.xlu0 %v99, 16
    %v145 = vpop.permute.xlu0 %144
    %146 = vrot.lane.b32.xlu0 %v102, 16
    %v147 = vpop.permute.xlu0 %146
    %148 = vrot.lane.b32.xlu0 %v105, 16
    %v149 = vpop.permute.xlu0 %148
    %150 = vrot.lane.b32.xlu0 %v108, 16
    %v151 = vpop.permute.xlu0 %150
    %152 = vrot.lane.b32.xlu0 %v111, 16
    %v153 = vpop.permute.xlu0 %152
    %154 = vrot.lane.b32.xlu0 %v114, 16
    %v155 = vpop.permute.xlu0 %154
    %156 = vrot.lane.b32.xlu0 %v117, 16
    %v157 = vpop.permute.xlu0 %156
    %158 = vrot.lane.b32.xlu0 %v120, 16
    %v159 = vpop.permute.xlu0 %158
    %160 = vrot.lane.b32.xlu0 %v123, 16
    %v161 = vpop.permute.xlu0 %160
    %162 = vrot.lane.b32.xlu0 %v126, 16
    %v163 = vpop.permute.xlu0 %162
    %164 = vrot.lane.b32.xlu0 %v129, 16
    %v165 = vpop.permute.xlu0 %164
    %166 = vrot.lane.b32.xlu0 %v132, 16
    %v167 = vpop.permute.xlu0 %166
    %168 = vrot.lane.b32.xlu0 %v135, 16
    %v169 = vpop.permute.xlu0 %168
    %170 = vrot.lane.b32.xlu0 %v138, 16
    %v171 = vpop.permute.xlu0 %170
    %172 = vrot.lane.b32.xlu0 %v141, 16
    %v173 = vpop.permute.xlu0 %172
    %v174 = vsel %vm93, %v143, %v42
    %v175 = vsel %vm93, %v145, %v43
    %v176 = vsel %vm93, %v147, %v44
    %v177 = vsel %vm93, %v149, %v45
    %v178 = vsel %vm93, %v151, %v46
    %v179 = vsel %vm93, %v153, %v47
    %v180 = vsel %vm93, %v155, %v48
    %v181 = vsel %vm93, %v157, %v49
    %v182 = vsel %vm93, %v159, %v50
    %v183 = vsel %vm93, %v161, %v51
    %v184 = vsel %vm93, %v163, %v52
    %v185 = vsel %vm93, %v165, %v53
    %v186 = vsel %vm93, %v167, %v54
    %v187 = vsel %vm93, %v169, %v55
    %v188 = vsel %vm93, %v171, %v56
    %v189 = vsel %vm93, %v173, %v57
    %v190 = vsub.f32 %v42, %v85
    %v191 = vsub.f32 %v43, %v77
    %v192 = vsub.f32 %v44, %v86
    %v193 = vsub.f32 %v45, %v78
    %v194 = vsub.f32 %v46, %v87
    %v195 = vsub.f32 %v47, %v79
    %v196 = vsub.f32 %v48, %v88
    %v197 = vsub.f32 %v49, %v80
    %v198 = vsub.f32 %v50, %v89
    %v199 = vsub.f32 %v51, %v81
    %v200 = vsub.f32 %v52, %v90
    %v201 = vsub.f32 %v53, %v82
    %v202 = vsub.f32 %v54, %v91
    %v203 = vsub.f32 %v55, %v83
    %v204 = vsub.f32 %v56, %v92
    %v205 = vsub.f32 %v57, %v84
    %222 = vrot.lane.b32.xlu0 %v174, 113
    %v223 = vpop.permute.xlu0 %222
    %224 = vrot.lane.b32.xlu0 %v175, 113
    %v225 = vpop.permute.xlu0 %224
    %226 = vrot.lane.b32.xlu0 %v176, 113
    %v227 = vpop.permute.xlu0 %226
    %228 = vrot.lane.b32.xlu0 %v177, 113
    %v229 = vpop.permute.xlu0 %228
    %230 = vrot.lane.b32.xlu0 %v178, 113
    %v231 = vpop.permute.xlu0 %230
    %232 = vrot.lane.b32.xlu0 %v179, 113
    %v233 = vpop.permute.xlu0 %232
    %234 = vrot.lane.b32.xlu0 %v180, 113
    %v235 = vpop.permute.xlu0 %234
    %236 = vrot.lane.b32.xlu0 %v181, 113
    %v237 = vpop.permute.xlu0 %236
    %238 = vrot.lane.b32.xlu0 %v182, 113
    %v239 = vpop.permute.xlu0 %238
    %240 = vrot.lane.b32.xlu0 %v183, 113
    %v241 = vpop.permute.xlu0 %240
    %242 = vrot.lane.b32.xlu0 %v184, 113
    %v243 = vpop.permute.xlu0 %242
    %244 = vrot.lane.b32.xlu0 %v185, 113
    %v245 = vpop.permute.xlu0 %244
    %246 = vrot.lane.b32.xlu0 %v186, 113
    %v247 = vpop.permute.xlu0 %246
    %248 = vrot.lane.b32.xlu0 %v187, 113
    %v249 = vpop.permute.xlu0 %248
    %250 = vrot.lane.b32.xlu0 %v188, 113
    %v251 = vpop.permute.xlu0 %250
    %252 = vrot.lane.b32.xlu0 %v189, 113
    %v253 = vpop.permute.xlu0 %252
    %v270 = vsub.f32 %v42, %v223
    %v271 = vsub.f32 %v43, %v225
    %v272 = vsub.f32 %v44, %v227
    %v273 = vsub.f32 %v45, %v229
    %v274 = vsub.f32 %v46, %v231
    %v275 = vsub.f32 %v47, %v233
    %v276 = vsub.f32 %v48, %v235
    %v277 = vsub.f32 %v49, %v237
    %v278 = vsub.f32 %v50, %v239
    %v279 = vsub.f32 %v51, %v241
    %v280 = vsub.f32 %v52, %v243
    %v281 = vsub.f32 %v53, %v245
    %v282 = vsub.f32 %v54, %v247
    %v283 = vsub.f32 %v55, %v249
    %v284 = vsub.f32 %v56, %v251
    %v285 = vsub.f32 %v57, %v253
    %v286 = vld [vmem:[#allocation5] sm:$0xff]
    %v287 = vld [vmem:[#allocation5 + $0x8] sm:$0xff]
    %v288 = vmul.f32 %v190, %v190
    %v289 = vmul.f32 %v191, %v191
    %v290 = vmul.f32 %v192, %v192
    %v291 = vmul.f32 %v193, %v193
    %v292 = vmul.f32 %v194, %v194
    %v293 = vmul.f32 %v195, %v195
    %v294 = vmul.f32 %v196, %v196
    %v295 = vmul.f32 %v197, %v197
    %v296 = vmul.f32 %v198, %v198
    %v297 = vmul.f32 %v199, %v199
    %v298 = vmul.f32 %v200, %v200
    %v299 = vmul.f32 %v201, %v201
    %v300 = vmul.f32 %v202, %v202
    %v301 = vmul.f32 %v203, %v203
    %v302 = vmul.f32 %v204, %v204
    %v303 = vmul.f32 %v205, %v205
    %vm304 = vcmask 130048
    %v305 = vsel %vm304, %v288, 0.0
    %v306 = vsel %vm304, %v290, 0.0
    %v307 = vadd.f32 %v305, %v306
    %v308 = vsel %vm304, %v292, 0.0
    %v309 = vadd.f32 %v307, %v308
    %v310 = vsel %vm304, %v294, 0.0
    %v311 = vadd.f32 %v309, %v310
    %v312 = vsel %vm304, %v296, 0.0
    %v313 = vadd.f32 %v311, %v312
    %v314 = vsel %vm304, %v298, 0.0
    %v315 = vadd.f32 %v313, %v314
    %v316 = vsel %vm304, %v300, 0.0
    %v317 = vadd.f32 %v315, %v316
    %v318 = vsel %vm304, %v302, 0.0
    %v319 = vadd.f32 %v317, %v318
    %v320 = vsel %vm304, %v289, 0.0
    %v321 = vsel %vm304, %v291, 0.0
    %v322 = vadd.f32 %v320, %v321
    %v323 = vsel %vm304, %v293, 0.0
    %v324 = vadd.f32 %v322, %v323
    %v325 = vsel %vm304, %v295, 0.0
    %v326 = vadd.f32 %v324, %v325
    %v327 = vsel %vm304, %v297, 0.0
    %v328 = vadd.f32 %v326, %v327
    %v329 = vsel %vm304, %v299, 0.0
    %v330 = vadd.f32 %v328, %v329
    %v331 = vsel %vm304, %v301, 0.0
    %v332 = vadd.f32 %v330, %v331
    %v333 = vsel %vm304, %v303, 0.0
    %v334 = vadd.f32 %v332, %v333
    %v335 = vadd.f32 %v286, %v319
    %v336 = vadd.f32 %v287, %v334
    %337 = vst.msk [vmem:[#allocation5] sm:$0xff] %vm304, %v335
    %338 = vst.msk [vmem:[#allocation5 + $0x8] sm:$0xff] %vm304, %v336
    %v339 = vld [vmem:[#allocation6] sm:$0xff]
    %v340 = vld [vmem:[#allocation6 + $0x8] sm:$0xff]
    %v341 = vmul.f32 %v270, %v270
    %v342 = vmul.f32 %v271, %v271
    %v343 = vmul.f32 %v272, %v272
    %v344 = vmul.f32 %v273, %v273
    %v345 = vmul.f32 %v274, %v274
    %v346 = vmul.f32 %v275, %v275
    %v347 = vmul.f32 %v276, %v276
    %v348 = vmul.f32 %v277, %v277
    %v349 = vmul.f32 %v278, %v278
    %v350 = vmul.f32 %v279, %v279
    %v351 = vmul.f32 %v280, %v280
    %v352 = vmul.f32 %v281, %v281
    %v353 = vmul.f32 %v282, %v282
    %v354 = vmul.f32 %v283, %v283
    %v355 = vmul.f32 %v284, %v284
    %v356 = vmul.f32 %v285, %v285
    %v357 = vsel %vm304, %v341, 0.0
    %v358 = vsel %vm304, %v343, 0.0
    %v359 = vadd.f32 %v357, %v358
    %v360 = vsel %vm304, %v345, 0.0
    %v361 = vadd.f32 %v359, %v360
    %v362 = vsel %vm304, %v347, 0.0
    %v363 = vadd.f32 %v361, %v362
    %v364 = vsel %vm304, %v349, 0.0
    %v365 = vadd.f32 %v363, %v364
    %v366 = vsel %vm304, %v351, 0.0
    %v367 = vadd.f32 %v365, %v366
    %v368 = vsel %vm304, %v353, 0.0
    %v369 = vadd.f32 %v367, %v368
    %v370 = vsel %vm304, %v355, 0.0
    %v371 = vadd.f32 %v369, %v370
    %v372 = vsel %vm304, %v342, 0.0
    %v373 = vsel %vm304, %v344, 0.0
    %v374 = vadd.f32 %v372, %v373
    %v375 = vsel %vm304, %v346, 0.0
    %v376 = vadd.f32 %v374, %v375
    %v377 = vsel %vm304, %v348, 0.0
    %v378 = vadd.f32 %v376, %v377
    %v379 = vsel %vm304, %v350, 0.0
    %v380 = vadd.f32 %v378, %v379
    %v381 = vsel %vm304, %v352, 0.0
    %v382 = vadd.f32 %v380, %v381
    %v383 = vsel %vm304, %v354, 0.0
    %v384 = vadd.f32 %v382, %v383
    %v385 = vsel %vm304, %v356, 0.0
    %v386 = vadd.f32 %v384, %v385
    %v387 = vadd.f32 %v339, %v371
    %v388 = vadd.f32 %v340, %v386
    %389 = vst.msk [vmem:[#allocation6] sm:$0xff] %vm304, %v387
    %390 = vst.msk [vmem:[#allocation6 + $0x8] sm:$0xff] %vm304, %v388
    %v399 = vrot.slane %v43, 7
    %v400 = vrot.slane %v45, 7
    %v401 = vrot.slane %v47, 7
    %v402 = vrot.slane %v49, 7
    %v403 = vrot.slane %v51, 7
    %v404 = vrot.slane %v53, 7
    %v405 = vrot.slane %v55, 7
    %v406 = vrot.slane %v57, 7
    %v415 = vsub.f32 %v42, %v399
    %v416 = vsub.f32 %v44, %v400
    %v417 = vsub.f32 %v46, %v401
    %v418 = vsub.f32 %v48, %v402
    %v419 = vsub.f32 %v50, %v403
    %v420 = vsub.f32 %v52, %v404
    %v421 = vsub.f32 %v54, %v405
    %v422 = vsub.f32 %v56, %v406
    %431 = vrot.lane.b32.xlu0 %v42, 113
    %v432 = vpop.permute.xlu0 %431
    %433 = vrot.lane.b32.xlu0 %v43, 113
    %v434 = vpop.permute.xlu0 %433
    %435 = vrot.lane.b32.xlu0 %v44, 113
    %v436 = vpop.permute.xlu0 %435
    %437 = vrot.lane.b32.xlu0 %v45, 113
    %v438 = vpop.permute.xlu0 %437
    %439 = vrot.lane.b32.xlu0 %v46, 113
    %v440 = vpop.permute.xlu0 %439
    %441 = vrot.lane.b32.xlu0 %v47, 113
    %v442 = vpop.permute.xlu0 %441
    %443 = vrot.lane.b32.xlu0 %v48, 113
    %v444 = vpop.permute.xlu0 %443
    %445 = vrot.lane.b32.xlu0 %v49, 113
    %v446 = vpop.permute.xlu0 %445
    %447 = vrot.lane.b32.xlu0 %v50, 113
    %v448 = vpop.permute.xlu0 %447
    %449 = vrot.lane.b32.xlu0 %v51, 113
    %v450 = vpop.permute.xlu0 %449
    %451 = vrot.lane.b32.xlu0 %v52, 113
    %v452 = vpop.permute.xlu0 %451
    %453 = vrot.lane.b32.xlu0 %v53, 113
    %v454 = vpop.permute.xlu0 %453
    %455 = vrot.lane.b32.xlu0 %v54, 113
    %v456 = vpop.permute.xlu0 %455
    %457 = vrot.lane.b32.xlu0 %v55, 113
    %v458 = vpop.permute.xlu0 %457
    %459 = vrot.lane.b32.xlu0 %v56, 113
    %v460 = vpop.permute.xlu0 %459
    %461 = vrot.lane.b32.xlu0 %v57, 113
    %v462 = vpop.permute.xlu0 %461
    %v479 = vsub.f32 %v42, %v432
    %v480 = vsub.f32 %v43, %v434
    %v481 = vsub.f32 %v44, %v436
    %v482 = vsub.f32 %v45, %v438
    %v483 = vsub.f32 %v46, %v440
    %v484 = vsub.f32 %v47, %v442
    %v485 = vsub.f32 %v48, %v444
    %v486 = vsub.f32 %v49, %v446
    %v487 = vsub.f32 %v50, %v448
    %v488 = vsub.f32 %v51, %v450
    %v489 = vsub.f32 %v52, %v452
    %v490 = vsub.f32 %v53, %v454
    %v491 = vsub.f32 %v54, %v456
    %v492 = vsub.f32 %v55, %v458
    %v493 = vsub.f32 %v56, %v460
    %v494 = vsub.f32 %v57, %v462
    %v495 = vld [vmem:[#allocation8] sm:$0x1]
    %v496 = vmul.f32 %v415, %v415
    %v497 = vmul.f32 %v416, %v416
    %v498 = vmul.f32 %v417, %v417
    %v499 = vmul.f32 %v418, %v418
    %v500 = vmul.f32 %v419, %v419
    %v501 = vmul.f32 %v420, %v420
    %v502 = vmul.f32 %v421, %v421
    %v503 = vmul.f32 %v422, %v422
    %vm504 = vcmask 122880
    %v505 = vsel %vm504, %v496, 0.0
    %v506 = vsel %vm504, %v497, 0.0
    %v507 = vadd.f32 %v505, %v506
    %v508 = vsel %vm504, %v498, 0.0
    %v509 = vadd.f32 %v507, %v508
    %v510 = vsel %vm504, %v499, 0.0
    %v511 = vadd.f32 %v509, %v510
    %v512 = vsel %vm504, %v500, 0.0
    %v513 = vadd.f32 %v511, %v512
    %v514 = vsel %vm504, %v501, 0.0
    %v515 = vadd.f32 %v513, %v514
    %v516 = vsel %vm504, %v502, 0.0
    %v517 = vadd.f32 %v515, %v516
    %v518 = vsel %vm504, %v503, 0.0
    %v519 = vadd.f32 %v517, %v518
    %v520 = vadd.f32 %v495, %v519
    %521 = vst.msk [vmem:[#allocation8] sm:$0x1] %vm504, %v520
    %v522 = vld [vmem:[%s4] sm:$0xff]
    %v523 = vld [vmem:[%s4 + $0x8] sm:$0xff]
    %v524 = vmul.f32 %v479, %v479
    %v525 = vmul.f32 %v480, %v480
    %v526 = vmul.f32 %v481, %v481
    %v527 = vmul.f32 %v482, %v482
    %v528 = vmul.f32 %v483, %v483
    %v529 = vmul.f32 %v484, %v484
    %v530 = vmul.f32 %v485, %v485
    %v531 = vmul.f32 %v486, %v486
    %v532 = vmul.f32 %v487, %v487
    %v533 = vmul.f32 %v488, %v488
    %v534 = vmul.f32 %v489, %v489
    %v535 = vmul.f32 %v490, %v490
    %v536 = vmul.f32 %v491, %v491
    %v537 = vmul.f32 %v492, %v492
    %v538 = vmul.f32 %v493, %v493
    %v539 = vmul.f32 %v494, %v494
    %vm540 = vcmask 7168
    %v541 = vsel %vm540, %v524, 0.0
    %v542 = vsel %vm540, %v526, 0.0
    %v543 = vadd.f32 %v541, %v542
    %v544 = vsel %vm540, %v528, 0.0
    %v545 = vadd.f32 %v543, %v544
    %v546 = vsel %vm540, %v530, 0.0
    %v547 = vadd.f32 %v545, %v546
    %v548 = vsel %vm540, %v532, 0.0
    %v549 = vadd.f32 %v547, %v548
    %v550 = vsel %vm540, %v534, 0.0
    %v551 = vadd.f32 %v549, %v550
    %v552 = vsel %vm540, %v536, 0.0
    %v553 = vadd.f32 %v551, %v552
    %v554 = vsel %vm540, %v538, 0.0
    %v555 = vadd.f32 %v553, %v554
    %v556 = vsel %vm540, %v525, 0.0
    %v557 = vsel %vm540, %v527, 0.0
    %v558 = vadd.f32 %v556, %v557
    %v559 = vsel %vm540, %v529, 0.0
    %v560 = vadd.f32 %v558, %v559
    %v561 = vsel %vm540, %v531, 0.0
    %v562 = vadd.f32 %v560, %v561
    %v563 = vsel %vm540, %v533, 0.0
    %v564 = vadd.f32 %v562, %v563
    %v565 = vsel %vm540, %v535, 0.0
    %v566 = vadd.f32 %v564, %v565
    %v567 = vsel %vm540, %v537, 0.0
    %v568 = vadd.f32 %v566, %v567
    %v569 = vsel %vm540, %v539, 0.0
    %v570 = vadd.f32 %v568, %v569
    %v571 = vadd.f32 %v522, %v555
    %v572 = vadd.f32 %v523, %v570
    %573 = vst.msk [vmem:[%s4] sm:$0xff] %vm540, %v571
    %574 = vst.msk [vmem:[%s4 + $0x8] sm:$0xff] %vm540, %v572
    // Predicated region
    $region14: #{tpu_custom_call.1} parent=1 // pred_check
      _
    $region15: #{tpu_custom_call.1} parent=1 // pred_check_branch
      %576 = sbr.rel (0) target = $region17
    $region16: #{tpu_custom_call.1} parent=1 // pred_region
      %s578 = ssub.s32 256, 256
      %579 = vsyncadd [#allocation4], %s578
      %s580 = sshll.u32 [#allocation5], 4
      %s581 = int_to_ptr.vmem [resolvable:$true] %s580
      %586 = dma.vmem_to_hbm [thread:$0]  %s581, 256, %s1, [#allocation4], 128, 128, 8
    $region17: #{tpu_custom_call.1} parent=1 // pred_fallthru
      _
    // Predicated region
    $region18: #{tpu_custom_call.1} parent=1 // pred_check
      _
    $region19: #{tpu_custom_call.1} parent=1 // pred_check_branch
      %588 = sbr.rel (0) target = $region21
    $region20: #{tpu_custom_call.1} parent=1 // pred_region
      %s590 = ssub.s32 256, 256
      %591 = vsyncadd [#allocation7], %s590
      %s592 = sshll.u32 [#allocation6], 4
      %s593 = int_to_ptr.vmem [resolvable:$true] %s592
      %598 = dma.vmem_to_hbm [thread:$0]  %s593, 256, %s2, [#allocation7], 128, 128, 8
    $region21: #{tpu_custom_call.1} parent=1 // pred_fallthru
      _
    // Predicated region
    $region22: #{tpu_custom_call.1} parent=1 // pred_check
      _
    $region23: #{tpu_custom_call.1} parent=1 // pred_check_branch
      %600 = sbr.rel (0) target = $region25
    $region24: #{tpu_custom_call.1} parent=1 // pred_region
      %s602 = ssub.s32 16, 16
      %603 = vsyncadd [#allocation7], %s602
      %s605 = sshll.u32 [#allocation8], 4
      %s606 = int_to_ptr.vmem [resolvable:$true] %s605
      %608 = dma.vmem_to_hbm [thread:$0]  %s606, 16, %s3, [#allocation7]
    $region25: #{tpu_custom_call.1} parent=1 // pred_fallthru
      _
    // Predicated region
    $region26: #{tpu_custom_call.1} parent=1 // pred_check
      _
    $region27: #{tpu_custom_call.1} parent=1 // pred_check_branch
      %610 = sbr.rel (0) target = $region29
    $region28: #{tpu_custom_call.1} parent=1 // pred_region
      _
    $region29: #{tpu_custom_call.1} parent=1 // pred_fallthru
      _
    // Predicated region
    $region30: #{tpu_custom_call.1} parent=1 // pred_check
      _
    $region31: #{tpu_custom_call.1} parent=1 // pred_check_branch
      %612 = sbr.rel (0) target = $region33
    $region32: #{tpu_custom_call.1} parent=1 // pred_region
      %613 = dma.done [#allocation4], 256
    $region33: #{tpu_custom_call.1} parent=1 // pred_fallthru
      _
    // Predicated region
    $region34: #{tpu_custom_call.1} parent=1 // pred_check
      _
    $region35: #{tpu_custom_call.1} parent=1 // pred_check_branch
      %615 = sbr.rel (0) target = $region37
    $region36: #{tpu_custom_call.1} parent=1 // pred_region
      %616 = dma.done [#allocation7], 256
    $region37: #{tpu_custom_call.1} parent=1 // pred_fallthru
      _
    // Predicated region
    $region38: #{tpu_custom_call.1} parent=1 // pred_check
      _
    $region39: #{tpu_custom_call.1} parent=1 // pred_check_branch
      %618 = sbr.rel (0) target = $region41
    $region40: #{tpu_custom_call.1} parent=1 // pred_region
      %619 = dma.done [#allocation7], 16
    $region41: #{tpu_custom_call.1} parent=1 // pred_fallthru
      _
    // Predicated region
    $region42: #{tpu_custom_call.1} parent=1 // pred_check
      _
    $region43: #{tpu_custom_call.1} parent=1 // pred_check_branch
      %621 = sbr.rel (0) target = $region45
    $region44: #{tpu_custom_call.1} parent=1 // pred_region
      _
    $region45: #{tpu_custom_call.1} parent=1 // pred_fallthru
      _
    %622 = vsyncpa [#allocation3], 1
    %623 = vsyncpa [#allocation4], 1
    %624 = vsyncpa [#allocation7], 1

</llo_original>
